<compile_context>
chip_gen: v6e
topology: v6e:2x2x1
jax: 0.10.0
libtpu: 0.0.40
codegen_flags: <defaults>
</compile_context>

<pallas_src>
import functools

import jax
import jax.numpy as jnp
from jax import lax
from jax.experimental import pallas as pl
from jax.experimental.pallas import tpu as pltpu


def _round_up(x, m):
    return (x + m - 1) // m * m


def _cdiv(a, b):
    return -(-a // b)


def _linear_bias_kernel(x_ref, w_ref, b_ref, o_ref):
    """One (tm, tn) output tile of  out = x @ W^T + b.

    x_ref: (tm, tk)  activations
    w_ref: (tn, tk)  weight tile in native PyTorch (out, in) layout;
                     contracted on its last dim (NT matmul, no transpose).
    b_ref: (1, tn)   bias row
    o_ref: (tm, tn)  f32 output tile, used directly as the accumulator
                     (block index is constant across the K axis, so the tile
                     stays resident in VMEM for the whole reduction).
    Grid axis 2 is the K reduction (innermost, "arbitrary").
    """
    k = pl.program_id(2)

    # Seed the resident output tile with the broadcast bias at the first
    # K step instead of adding it in an epilogue.
    @pl.when(k == 0)
    def _():
        o_ref[...] = jnp.broadcast_to(b_ref[...], o_ref.shape).astype(o_ref.dtype)

    o_ref[...] += lax.dot_general(
        x_ref[...],
        w_ref[...],
        dimension_numbers=(((1,), (1,)), ((), ())),  # contract x.K with w.K
        preferred_element_type=jnp.float32,
    )


def _choose_tiles(M, N, K):
    """Pick (tm, tn, tk) per the HBM-bound-on-W roofline.

    - one i block whenever M <= 1024 so W is read from HBM exactly once
    - tn/tk up to 1024 (lane-dense, amortizes per-step overhead)
    - >= 2 N blocks when N allows, so v7x's 2 TensorCores both get work
    - double-buffered f32 footprint stays <= ~24 MiB (fits v7x's 64 MiB
      physical VMEM and v6e's 32 MiB scoped default; v5e gets an explicit
      vmem_limit_bytes bump).
    """
    M8 = _round_up(max(M, 1), 8)
    tm = M8 if M8 <= 1024 else 512  # single i block for typical batch sizes

    tk = min(1024, _round_up(K, 128))

    Np128 = _round_up(N, 128)
    tn = min(1024, Np128)
    if Np128 >= 256 and Np128 // tn < 2:
        # Ensure at least 2 blocks on the parallel N axis (v7x megacore).
        tn = _round_up(_cdiv(Np128, 2), 128)
    return tm, tn, tk


@jax.jit
def softmax_head_forward(x, weight, bias, label=None):
    """Equivalent of Softmax.forward with device_id=None: F.linear(x, W, b).

    x:      (M, K) float32
    weight: (N, K) float32  (PyTorch Linear convention, consumed as-is)
    bias:   (N,)   float32
    label:  accepted but unused (matches the PyTorch forward signature)
    returns (M, N) float32 raw logits
    """
    del label  # unused in the device_id=None path, as in the PyTorch module

    M, K = x.shape
    N, K2 = weight.shape
    assert K == K2 and bias.shape == (N,)
    # Direct accumulation into the output tile requires an f32 output; if this
    # head is ever emitted in bf16, reintroduce an f32 VMEM scratch accumulator.
    assert x.dtype == jnp.float32 and weight.dtype == jnp.float32

    tm, tn, tk = _choose_tiles(M, N, K)
    Mp, Np, Kp = _round_up(M, tm), _round_up(N, tn), _round_up(K, tk)

    # Zero-padding K is exact for a matmul; padded N/M rows are sliced off.
    xp = x if (Mp == M and Kp == K) else jnp.pad(x, ((0, Mp - M), (0, Kp - K)))
    wp = (
        weight
        if (Np == N and Kp == K)
        else jnp.pad(weight, ((0, Np - N), (0, Kp - K)))
    )
    bp = (bias if Np == N else jnp.pad(bias, (0, Np - N))).reshape(1, Np)

    grid = (Mp // tm, Np // tn, Kp // tk)

    # Double-buffered f32 footprint (x, W, out, bias); bump the scoped VMEM
    # limit above v5e's 16 MiB default, stay well under v7x's 64 MiB physical.
    vmem_bytes = 4 * (2 * tm * tk + 2 * tn * tk + 2 * tm * tn + 2 * tn)
    vmem_limit = int(min(48 * 1024 * 1024, max(32 * 1024 * 1024, vmem_bytes * 6 // 5)))

    out = pl.pallas_call(
        _linear_bias_kernel,
        out_shape=jax.ShapeDtypeStruct((Mp, Np), jnp.float32),
        grid_spec=pltpu.PrefetchScalarGridSpec(
            num_scalar_prefetch=0,
            grid=grid,
            in_specs=[
                pl.BlockSpec((tm, tk), lambda i, j, k: (i, k)),  # x tile
                pl.BlockSpec((tn, tk), lambda i, j, k: (j, k)),  # W tile (native N,K)
                pl.BlockSpec((1, tn), lambda i, j, k: (0, j)),   # bias row
            ],
            out_specs=pl.BlockSpec((tm, tn), lambda i, j, k: (i, j)),
        ),
        compiler_params=pltpu.CompilerParams(
            dimension_semantics=("parallel", "parallel", "arbitrary"),
            vmem_limit_bytes=vmem_limit,
        ),
    )(xp, wp, bp)

    if Mp != M or Np != N:
        out = out[:M, :N]
    return out


def init_params(key, in_features, out_features):
    """Deterministic xavier_uniform_ weight + zero bias (PyTorch __init__)."""
    bound = (6.0 / (in_features + out_features)) ** 0.5
    weight = jax.random.uniform(
        key,
        (out_features, in_features),
        dtype=jnp.float32,
        minval=-bound,
        maxval=bound,
    )
    bias = jnp.zeros((out_features,), dtype=jnp.float32)
    return weight, bias


if __name__ == "__main__":
    in_features = 128
    out_features = 256
    batch = 8

    key = jax.random.PRNGKey(0)
    kx, kw, kl = jax.random.split(key, 3)

    x = jax.random.normal(kx, (batch, in_features), dtype=jnp.float32)
    label = jax.random.randint(kl, (batch,), 0, out_features)  # unused, as in torch
    weight, bias = init_params(kw, in_features, out_features)

    out = softmax_head_forward(x, weight, bias, label)
    out = jax.block_until_ready(out)

    # sanity check against plain JAX reference
    ref = x @ weight.T + bias
    assert out.shape == (batch, out_features)
    assert jnp.allclose(out, ref, atol=1e-4, rtol=1e-4)

    print("KERNEL_OK")
</pallas_src>

<mosaic_0001>
module attributes {stable_mosaic.version = 11 : i64} {
  func.func @_linear_bias_kernel(%arg0: i32, %arg1: i32, %arg2: i32, %arg3: memref<8x128xf32, #tpu.memory_space<vmem>>, %arg4: memref<128x128xf32, #tpu.memory_space<vmem>>, %arg5: memref<1x128xf32, #tpu.memory_space<vmem>>, %arg6: memref<8x128xf32, #tpu.memory_space<vmem>>) attributes {dimension_semantics = [#tpu.dimension_semantics<parallel>, #tpu.dimension_semantics<parallel>, #tpu.dimension_semantics<arbitrary>], iteration_bounds = array<i64: 1, 2, 1>, scalar_prefetch = 0 : i64, scratch_operands = 0 : i64, tpu.core_type = #tpu.core_type<tc>, window_params = [{transform_indices = @transform_0, window_bounds = array<i64: 8, 128>}, {transform_indices = @transform_1, window_bounds = array<i64: 128, 128>}, {transform_indices = @transform_2, window_bounds = array<i64: 1, 128>}, {transform_indices = @transform_3, window_bounds = array<i64: 8, 128>}]} {
    %c0_i32 = arith.constant 0 : i32
    %0 = arith.cmpi eq, %arg2, %c0_i32 : i32
    %1 = arith.extui %0 : i1 to i32
    %c0_i32_0 = arith.constant 0 : i32
    %2 = arith.cmpi ne, %1, %c0_i32_0 : i32
    scf.if %2 {
      %c0_8 = arith.constant 0 : index
      %c0_9 = arith.constant 0 : index
      %9 = vector.load %arg5[%c0_8, %c0_9] : memref<1x128xf32, #tpu.memory_space<vmem>>, vector<1x128xf32>
      %10 = vector.shape_cast %9 : vector<1x128xf32> to vector<1x128xf32>
      %11 = vector.broadcast %10 : vector<1x128xf32> to vector<8x128xf32>
      %c0_10 = arith.constant 0 : index
      %c0_11 = arith.constant 0 : index
      %12 = vector.load %arg6[%c0_10, %c0_11] : memref<8x128xf32, #tpu.memory_space<vmem>>, vector<8x128xf32>
      tpu.vector_store %arg6[%c0_10, %c0_11], %11 {strides = array<i32>} : memref<8x128xf32, #tpu.memory_space<vmem>>, vector<8x128xf32>,
    } else {
    }
    %c0 = arith.constant 0 : index
    %c0_1 = arith.constant 0 : index
    %3 = vector.load %arg6[%c0, %c0_1] : memref<8x128xf32, #tpu.memory_space<vmem>>, vector<8x128xf32>
    %c0_2 = arith.constant 0 : index
    %c0_3 = arith.constant 0 : index
    %4 = vector.load %arg3[%c0_2, %c0_3] : memref<8x128xf32, #tpu.memory_space<vmem>>, vector<8x128xf32>
    %c0_4 = arith.constant 0 : index
    %c0_5 = arith.constant 0 : index
    %5 = vector.load %arg4[%c0_4, %c0_5] : memref<128x128xf32, #tpu.memory_space<vmem>>, vector<128x128xf32>
    %cst = arith.constant dense<0.000000e+00> : vector<8x128xf32>
    %6 = tpu.matmul %4, %5, %cst {dimension_numbers = #tpu.dot_dimension_numbers<[1], [1], [0], [0], [0, 0, 1, 0], [], []>} : vector<8x128xf32>, vector<128x128xf32>, vector<8x128xf32> -> vector<8x128xf32>
    %7 = arith.addf %3, %6 : vector<8x128xf32>
    %c0_6 = arith.constant 0 : index
    %c0_7 = arith.constant 0 : index
    %8 = vector.load %arg6[%c0_6, %c0_7] : memref<8x128xf32, #tpu.memory_space<vmem>>, vector<8x128xf32>
    tpu.vector_store %arg6[%c0_6, %c0_7], %7 {strides = array<i32>} : memref<8x128xf32, #tpu.memory_space<vmem>>, vector<8x128xf32>,
    return
  }
  func.func @transform_0(%arg0: i32, %arg1: i32, %arg2: i32) -> (i32, i32) {
    %c0_i32 = arith.constant 0 : i32
    return %arg0, %arg2 : i32, i32
  }
  func.func @transform_1(%arg0: i32, %arg1: i32, %arg2: i32) -> (i32, i32) {
    %c0_i32 = arith.constant 0 : i32
    return %arg1, %arg2 : i32, i32
  }
  func.func @transform_2(%arg0: i32, %arg1: i32, %arg2: i32) -> (i32, i32) {
    %c0_i32 = arith.constant 0 : i32
    %c0_i32_0 = arith.constant 0 : i32
    return %c0_i32, %arg1 : i32, i32
  }
  func.func @transform_3(%arg0: i32, %arg1: i32, %arg2: i32) -> (i32, i32) {
    %c0_i32 = arith.constant 0 : i32
    return %arg0, %arg1 : i32, i32
  }
}

</mosaic_0001>

<llo_original>
// kernel: softmax_head_forward.1
$region0: #{softmax_head_forward.1}
  #allocation0 [shape = 'u32[]', space=smem, size = 0x4, offset = 0x4, fixed_abs, tag = 'smem constant byte address 0x4 - core index']
  #allocation1 [shape = 'u32[144,128]{1,0:T(1,128)}', space=vmem, size = 0x12000, scoped, tag = 'internal scratch']
  %s0 = inlined_call_operand.hbm [shape: f32[8,128], index: 0, kind: input, shape index: {}]
  %s1 = inlined_call_operand.hbm [shape: f32[256,128], index: 1, kind: input, shape index: {}]
  %s2 = inlined_call_operand.vmem [shape: f32[1,256], index: 2, kind: input, shape index: {}]
  %s3 = inlined_call_operand.hbm [shape: f32[8,256], index: 3, kind: output, shape index: {}]
  %s4 = sld [smem:[#allocation0]]
  $region57: #{softmax_head_forward.1} parent=0
    _
  %s6 = ssub.s32 1, %s4
  %s7 = scalar_select 0, %s6, %s4
  $region1: #{softmax_head_forward.1} parent=0
    #allocation2 [shape = 'u8[4096]{0}', space=vmem, size = 0x1000, scoped, tag = 'input window, operand 0, single buffered']
    #allocation3 [shape = 's32[2]{0}', space=sflag, size = 0x8, scoped, tag = 'scoped memory for softmax_head_forward.1']
    #allocation4 [shape = 's32[2]{0}', space=sflag, size = 0x8, scoped, tag = 'scoped memory for softmax_head_forward.1']
    #allocation5 [shape = 'u8[131072]{0}', space=vmem, size = 0x20000, scoped, tag = 'input window, operand 1']
    #allocation6 [shape = 's32[2]{0}', space=sflag, size = 0x8, scoped, tag = 'scoped memory for softmax_head_forward.1']
    #allocation7 [shape = 'u8[8192]{0}', space=vmem, size = 0x2000, scoped, tag = 'output window, operand 0']
    %8 = vsyncpa [#allocation3], 0
    %9 = vsyncpa [#allocation6], 0
    %s10 = scalar_lea.sflag [#allocation6], 1
    %11 = vsyncpa %s10, 0
    %12 = vsyncpa [#allocation4], 0
    %s13 = scalar_lea.sflag [#allocation4], 1
    %14 = vsyncpa %s13, 0
    loop: start=0, step=1, limit=4
    $region2: #{softmax_head_forward.1} parent=1 // loop_pre_header
      _
    $region3: #{softmax_head_forward.1} parent=1 // loop_header
      %s16 = sphi 0, %s20
      %p17 = scmp.ge.s32.totalorder %s16, 4
      %s23 = sphi 0, %s42
      %s24 = sphi 0, %s38
      %s25 = sphi 0, %s34
      %s26 = sphi 0, %s23
      %s27 = sphi 0, %s24
      %s28 = sphi 0, %s25
      %s29 = sphi 0, %s26
      %s30 = sphi 0, %s27
      %s31 = sphi 0, %s28
      %s47 = sphi 0, %s49
      %s50 = sphi 0, %s47
      %s51 = sphi 0, %s50
      %s67 = sphi 0, %s51
      %s75 = sphi 0, %s77
      %s78 = sphi 0, %s75
      %s79 = sphi 0, %s78
      %s95 = sphi 0, %s79
      %s101 = sphi 0, %s103
      %s104 = sphi 0, %s101
      %s105 = sphi 0, %s104
      %s121 = sphi 0, %s105
      %s129 = sphi 0, %s131
      %s132 = sphi 0, %s129
      %s133 = sphi 0, %s132
      %s149 = sphi 0, %s133
    $region4: #{softmax_head_forward.1} parent=1 // loop_header_branch
      %19 = sbr.rel (%p17) target = $region8
    $region5: #{softmax_head_forward.1} parent=1 // loop_body
      %s21 = ssub.s32 %s16, 1
      %s22 = ssub.s32 %s16, 2
      %s32 = sadd.s32 1, %s25
      %p33 = scmp.ge.s32.totalorder %s32, 1
      %s34 = scalar_select %p33, 0, %s32
      %s35 = sadd.s32 1, %s24
      %s36 = scalar_select %p33, %s35, %s24
      %p37 = scmp.ge.s32.totalorder %s36, 2
      %s38 = scalar_select %p37, 0, %s36
      %s39 = sadd.s32 1, %s23
      %s40 = scalar_select %p37, %s39, %s23
      %p41 = scmp.ge.s32.totalorder %s40, 1
      %s42 = scalar_select %p41, 0, %s40
      %s43 = ssub.s32 %s23, %s42
      %s44 = ssub.s32 %s25, %s34
      %s45 = sor.u32 %s43, %s44
      %p46 = scmp.eq.s32.totalorder %s45, 0
      %s48 = sadd.s32 %s47, 1
      %s49 = scalar_select %p46, %s47, %s48
      %p52 = pneg %p46
      %p53 = scmp.eq.s32.totalorder %s16, 1
      %p54 = por %p52, %p53
      %p55 = scmp.ne.s32.totalorder %s47, %s50
      %p56 = scmp.eq.s32.totalorder %s16, 0
      %p57 = por %p55, %p56
      %p58 = scmp.ne.s32.totalorder %s47, %s50
      %p59 = scmp.eq.s32.totalorder %s21, 1
      %p60 = por %p58, %p59
      %p61 = scmp.ne.s32.totalorder %s50, %s51
      %p62 = scmp.eq.s32.totalorder %s21, 0
      %p63 = por %p61, %p62
      %p64 = scmp.ne.s32.totalorder %s50, %s51
      %p65 = scmp.eq.s32.totalorder %s22, 1
      %p66 = por %p64, %p65
      %p68 = scmp.ne.s32.totalorder %s51, %s67
      %p69 = scmp.eq.s32.totalorder %s22, 0
      %p70 = por %p68, %p69
      %s71 = ssub.s32 %s24, %s38
      %s72 = ssub.s32 %s25, %s34
      %s73 = sor.u32 %s71, %s72
      %p74 = scmp.eq.s32.totalorder %s73, 0
      %s76 = sadd.s32 %s75, 1
      %s77 = scalar_select %p74, %s75, %s76
      %p80 = pneg %p74
      %p81 = scmp.eq.s32.totalorder %s16, 1
      %p82 = por %p80, %p81
      %p83 = scmp.ne.s32.totalorder %s75, %s78
      %p84 = scmp.eq.s32.totalorder %s16, 0
      %p85 = por %p83, %p84
      %p86 = scmp.ne.s32.totalorder %s75, %s78
      %p87 = scmp.eq.s32.totalorder %s21, 1
      %p88 = por %p86, %p87
      %p89 = scmp.ne.s32.totalorder %s78, %s79
      %p90 = scmp.eq.s32.totalorder %s21, 0
      %p91 = por %p89, %p90
      %p92 = scmp.ne.s32.totalorder %s78, %s79
      %p93 = scmp.eq.s32.totalorder %s22, 1
      %p94 = por %p92, %p93
      %p96 = scmp.ne.s32.totalorder %s79, %s95
      %p97 = scmp.eq.s32.totalorder %s22, 0
      %p98 = por %p96, %p97
      %s99 = ssub.s32 %s24, %s38
      %p100 = scmp.eq.s32.totalorder %s99, 0
      %s102 = sadd.s32 %s101, 1
      %s103 = scalar_select %p100, %s101, %s102
      %p106 = pneg %p100
      %p107 = scmp.eq.s32.totalorder %s16, 1
      %p108 = por %p106, %p107
      %p109 = scmp.ne.s32.totalorder %s101, %s104
      %p110 = scmp.eq.s32.totalorder %s16, 0
      %p111 = por %p109, %p110
      %p112 = scmp.ne.s32.totalorder %s101, %s104
      %p113 = scmp.eq.s32.totalorder %s21, 1
      %p114 = por %p112, %p113
      %p115 = scmp.ne.s32.totalorder %s104, %s105
      %p116 = scmp.eq.s32.totalorder %s21, 0
      %p117 = por %p115, %p116
      %p118 = scmp.ne.s32.totalorder %s104, %s105
      %p119 = scmp.eq.s32.totalorder %s22, 1
      %p120 = por %p118, %p119
      %p122 = scmp.ne.s32.totalorder %s105, %s121
      %p123 = scmp.eq.s32.totalorder %s22, 0
      %p124 = por %p122, %p123
      %s125 = ssub.s32 %s23, %s42
      %s126 = ssub.s32 %s24, %s38
      %s127 = sor.u32 %s125, %s126
      %p128 = scmp.eq.s32.totalorder %s127, 0
      %s130 = sadd.s32 %s129, 1
      %s131 = scalar_select %p128, %s129, %s130
      %p134 = pneg %p128
      %p135 = scmp.eq.s32.totalorder %s16, 1
      %p136 = por %p134, %p135
      %p137 = scmp.ne.s32.totalorder %s129, %s132
      %p138 = scmp.eq.s32.totalorder %s16, 0
      %p139 = por %p137, %p138
      %p140 = scmp.ne.s32.totalorder %s129, %s132
      %p141 = scmp.eq.s32.totalorder %s21, 1
      %p142 = por %p140, %p141
      %p143 = scmp.ne.s32.totalorder %s132, %s133
      %p144 = scmp.eq.s32.totalorder %s21, 0
      %p145 = por %p143, %p144
      %p146 = scmp.ne.s32.totalorder %s132, %s133
      %p147 = scmp.eq.s32.totalorder %s22, 1
      %p148 = por %p146, %p147
      %p150 = scmp.ne.s32.totalorder %s133, %s149
      %p151 = scmp.eq.s32.totalorder %s22, 0
      %p152 = por %p150, %p151
      %p153 = scmp.le.s32.totalorder 1, %s16
      %p154 = scmp.lt.s32.totalorder %s16, 3
      %p155 = pnand %p153, %p154
      %p156 = pneg %p155
      // Predicated region
      $region9: #{softmax_head_forward.1} parent=5 // pred_check
        _
      $region10: #{softmax_head_forward.1} parent=5 // pred_check_branch
        %158 = sbr.rel (%p155) target = $region12
      $region11: #{softmax_head_forward.1} parent=5 // pred_region
        %s159 = ssub.s32 %s16, 1
        // Predicated region
        $region13: #{softmax_head_forward.1} parent=11 // pred_check
          %p160 = pneg %p63
        $region14: #{softmax_head_forward.1} parent=11 // pred_check_branch
          %162 = sbr.rel (%p160) target = $region16
        $region15: #{softmax_head_forward.1} parent=11 // pred_region
          %s164 = ssub.s32 128, 128
          %165 = vsyncadd [#allocation3], %s164
          %s166 = sadd.s32 %s28, %s26
          %s167 = smul.addr %s166, 128
          %s168 = scalar_lea.hbm %s0, %s167
          %s170 = sshll.u32 [#allocation2], 4
          %s171 = int_to_ptr.vmem [resolvable:$true] %s170
          %173 = dma.hbm_to_vmem [thread:$0]  %s168, 128, %s171, [#allocation3]
        $region16: #{softmax_head_forward.1} parent=11 // pred_fallthru
          _
      $region12: #{softmax_head_forward.1} parent=5 // pred_fallthru
        _
      %p174 = scmp.lt.s32.totalorder %s16, 2
      // Predicated region
      $region17: #{softmax_head_forward.1} parent=5 // pred_check
        %p175 = pneg %p174
      $region18: #{softmax_head_forward.1} parent=5 // pred_check_branch
        %177 = sbr.rel (%p175) target = $region20
      $region19: #{softmax_head_forward.1} parent=5 // pred_region
        // Predicated region
        $region21: #{softmax_head_forward.1} parent=19 // pred_check
          %p178 = pneg %p85
        $region22: #{softmax_head_forward.1} parent=19 // pred_check_branch
          %180 = sbr.rel (%p178) target = $region24
        $region23: #{softmax_head_forward.1} parent=19 // pred_region
          %s181 = sand.u32 %s75, 1
          %s182 = scalar_lea.sflag [#allocation6], %s181
          %s183 = sand.u32 %s75, 1
          %s184 = smul.addr %s183, 128
          %s185 = scalar_lea.vmem [#allocation5], %s184
          %s186 = smul.u32 16, %s24
          %s188 = ssub.s32 2048, 2048
          %189 = vsyncadd %s182, %s188
          %s190 = sadd.s32 %s25, %s186
          %s191 = smul.addr %s190, 128
          %s192 = scalar_lea.hbm %s1, %s191
          %s193 = sshll.u32 %s185, 4
          %s194 = int_to_ptr.vmem [resolvable:$true] %s193
          %199 = dma.hbm_to_vmem [thread:$0]  %s192, 2048, %s194, %s182, 128, 128, 8
        $region24: #{softmax_head_forward.1} parent=19 // pred_fallthru
          _
        // Predicated region
        $region25: #{softmax_head_forward.1} parent=19 // pred_check
          %p200 = pneg %p111
        $region26: #{softmax_head_forward.1} parent=19 // pred_check_branch
          %202 = sbr.rel (%p200) target = $region28
        $region27: #{softmax_head_forward.1} parent=19 // pred_region
          %p203 = scmp.lt.s32.totalorder %s24, 1
          %s204 = scalar_select %p203, %s24, 1
          %s205 = scalar_lea.vmem %s2, %s204
        $region28: #{softmax_head_forward.1} parent=19 // pred_fallthru
          _
      $region20: #{softmax_head_forward.1} parent=5 // pred_fallthru
        _
      %p206 = scmp.le.s32.totalorder 1, %s16
      %p207 = scmp.lt.s32.totalorder %s16, 3
      %p208 = pnand %p206, %p207
      %p209 = pneg %p208
      // Predicated region
      $region29: #{softmax_head_forward.1} parent=5 // pred_check
        _
      $region30: #{softmax_head_forward.1} parent=5 // pred_check_branch
        %211 = sbr.rel (%p208) target = $region32
      $region31: #{softmax_head_forward.1} parent=5 // pred_region
        %s212 = ssub.s32 %s16, 1
        // Predicated region
        $region33: #{softmax_head_forward.1} parent=31 // pred_check
          %p213 = pneg %p63
        $region34: #{softmax_head_forward.1} parent=31 // pred_check_branch
          %215 = sbr.rel (%p213) target = $region36
        $region35: #{softmax_head_forward.1} parent=31 // pred_region
          %216 = dma.done [#allocation3], 128
        $region36: #{softmax_head_forward.1} parent=31 // pred_fallthru
          _
        %s217 = sand.u32 %s78, 1
        %s218 = scalar_lea.sflag [#allocation6], %s217
        %s219 = sand.u32 %s78, 1
        %s220 = smul.addr %s219, 128
        %s221 = scalar_lea.vmem [#allocation5], %s220
        // Predicated region
        $region37: #{softmax_head_forward.1} parent=31 // pred_check
          %p222 = pneg %p91
        $region38: #{softmax_head_forward.1} parent=31 // pred_check_branch
          %224 = sbr.rel (%p222) target = $region40
        $region39: #{softmax_head_forward.1} parent=31 // pred_region
          %225 = dma.done %s218, 2048
        $region40: #{softmax_head_forward.1} parent=31 // pred_fallthru
          _
        %p226 = pneg %p63
        %p227 = pneg %p60
        %s228 = sand.u32 %s78, 1
        %s229 = scalar_lea.sflag [#allocation6], %s228
        %s230 = sand.u32 %s78, 1
        %s231 = smul.addr %s230, 128
        %s232 = scalar_lea.vmem [#allocation5], %s231
        %p233 = pneg %p91
        %p234 = pneg %p88
        %p235 = scmp.lt.s32.totalorder %s27, 1
        %s236 = scalar_select %p235, %s27, 1
        %s237 = scalar_lea.vmem %s2, %s236
        %p238 = pneg %p117
        %p239 = pneg %p114
        %p240 = pneg %p145
        %p241 = pneg %p142
        %s242 = sand.u32 %s132, 1
        %s243 = scalar_lea.sflag [#allocation4], %s242
        %s244 = sand.u32 %s132, 1
        %s245 = smul.addr %s244, 8
        %s246 = scalar_lea.vmem [#allocation7], %s245
        %s247 = smul.u32 16, %s27
        %p248 = scmp.lt.s32.totalorder %s27, 1
        %s249 = scalar_select %p248, %s27, 1
        %s250 = scalar_lea.vmem %s2, %s249
        %p251 = scmp.eq.s32.totalorder %s28, 0
        // Predicated region
        $region41: #{softmax_head_forward.1} parent=31 // pred_check
          %p252 = pneg %p251
        $region42: #{softmax_head_forward.1} parent=31 // pred_check_branch
          %254 = sbr.rel (%p252) target = $region44
        $region43: #{softmax_head_forward.1} parent=31 // pred_region
          %v255 = vld [vmem:[%s250] sm:$0x1]
          %v257 = vlaneseq
          %v258 = vshrl.u32 %v257, 7
          %v259 = vsub.s32 0, %v258
          %v260 = vrot.slane %v255, %v259
          %262 = vst [vmem:[%s246] sm:$0xff] %v260
        $region44: #{softmax_head_forward.1} parent=31 // pred_fallthru
          _
        %v263 = vld [vmem:[%s246] sm:$0xff]
        %v264 = vld [vmem:[#allocation2] sm:$0xff]
        %v265 = vld [vmem:[%s221] sm:$0xff]
        %v266 = vld [vmem:[%s221 + $0x8] sm:$0xff]
        %v267 = vld [vmem:[%s221 + $0x10] sm:$0xff]
        %v268 = vld [vmem:[%s221 + $0x18] sm:$0xff]
        %v269 = vld [vmem:[%s221 + $0x20] sm:$0xff]
        %v270 = vld [vmem:[%s221 + $0x28] sm:$0xff]
        %v271 = vld [vmem:[%s221 + $0x30] sm:$0xff]
        %v272 = vld [vmem:[%s221 + $0x38] sm:$0xff]
        %v273 = vld [vmem:[%s221 + $0x40] sm:$0xff]
        %v274 = vld [vmem:[%s221 + $0x48] sm:$0xff]
        %v275 = vld [vmem:[%s221 + $0x50] sm:$0xff]
        %v276 = vld [vmem:[%s221 + $0x58] sm:$0xff]
        %v277 = vld [vmem:[%s221 + $0x60] sm:$0xff]
        %v278 = vld [vmem:[%s221 + $0x68] sm:$0xff]
        %v279 = vld [vmem:[%s221 + $0x70] sm:$0xff]
        %v280 = vld [vmem:[%s221 + $0x78] sm:$0xff]
        %281 = vmatprep.subr.mxu0 0.0
        %282 = vmatpush1.xpose.msra.mxu0 %v280
        %283 = vmatprep.subr.mxu0 0.0
        %284 = vmatpush1.xpose.msra.mxu0 %v279
        %285 = vmatprep.subr.mxu0 0.0
        %286 = vmatpush1.xpose.msra.mxu0 %v278
        %287 = vmatprep.subr.mxu0 0.0
        %288 = vmatpush1.xpose.msra.mxu0 %v277
        %289 = vmatprep.subr.mxu0 0.0
        %290 = vmatpush1.xpose.msra.mxu0 %v276
        %291 = vmatprep.subr.mxu0 0.0
        %292 = vmatpush1.xpose.msra.mxu0 %v275
        %293 = vmatprep.subr.mxu0 0.0
        %294 = vmatpush1.xpose.msra.mxu0 %v274
        %295 = vmatprep.subr.mxu0 0.0
        %296 = vmatpush1.xpose.msra.mxu0 %v273
        %297 = vmatprep.subr.mxu0 0.0
        %298 = vmatpush1.xpose.msra.mxu0 %v272
        %299 = vmatprep.subr.mxu0 0.0
        %300 = vmatpush1.xpose.msra.mxu0 %v271
        %301 = vmatprep.subr.mxu0 0.0
        %302 = vmatpush1.xpose.msra.mxu0 %v270
        %303 = vmatprep.subr.mxu0 0.0
        %304 = vmatpush1.xpose.msra.mxu0 %v269
        %305 = vmatprep.subr.mxu0 0.0
        %306 = vmatpush1.xpose.msra.mxu0 %v268
        %307 = vmatprep.subr.mxu0 0.0
        %308 = vmatpush1.xpose.msra.mxu0 %v267
        %309 = vmatprep.subr.mxu0 0.0
        %310 = vmatpush1.xpose.msra.mxu0 %v266
        %311 = vmatprep.subr.mxu0 0.0
        %312 = vmatpush1.xpose.msra.mxu0 %v265
        %313 = vmatprep.subr.mxu0 0.0
        %314 = vmatpush2.xpose.msra.mxu0 0.0
        %315 = vmatprep.subr.mxu0 0.0
        %316 = vmatpush2.xpose.msra.mxu0 0.0
        %317 = vmatprep.subr.mxu0 0.0
        %318 = vmatpush2.xpose.msra.mxu0 0.0
        %319 = vmatprep.subr.mxu0 0.0
        %320 = vmatpush2.xpose.msra.mxu0 0.0
        %321 = vmatprep.subr.mxu0 0.0
        %322 = vmatpush2.xpose.msra.mxu0 0.0
        %323 = vmatprep.subr.mxu0 0.0
        %324 = vmatpush2.xpose.msra.mxu0 0.0
        %325 = vmatprep.subr.mxu0 0.0
        %326 = vmatpush2.xpose.msra.mxu0 0.0
        %327 = vmatprep.subr.mxu0 0.0
        %328 = vmatpush2.xpose.msra.mxu0 0.0
        %329 = vmatprep.subr.mxu0 0.0
        %330 = vmatpush2.xpose.msra.mxu0 0.0
        %331 = vmatprep.subr.mxu0 0.0
        %332 = vmatpush2.xpose.msra.mxu0 0.0
        %333 = vmatprep.subr.mxu0 0.0
        %334 = vmatpush2.xpose.msra.mxu0 0.0
        %335 = vmatprep.subr.mxu0 0.0
        %336 = vmatpush2.xpose.msra.mxu0 0.0
        %337 = vmatprep.subr.mxu0 0.0
        %338 = vmatpush2.xpose.msra.mxu0 0.0
        %339 = vmatprep.subr.mxu0 0.0
        %340 = vmatpush2.xpose.msra.mxu0 0.0
        %341 = vmatprep.subr.mxu0 0.0
        %342 = vmatpush2.xpose.msra.mxu0 0.0
        %343 = vmatprep.subr.mxu0 0.0
        %344 = vmatpush2.xpose.msra.mxu0 0.0
        %345 = vmatprep.mubr.f32.mxu0 0.0
        %346 = vmatmul.mubr.f32.gmra.mxu0 %v264
        %v347 = vpop.f32.mrf.mxu0
        %v348 = vadd.f32 0.0, %v347
        %v349 = vpop.f32.mrf.mxu0
        %350 = vdwg.mxu0
        %v351 = vadd.f32 %v263, %v348
        %352 = vst [vmem:[%s246] sm:$0xff] %v351
        %s353 = sand.u32 %s132, 1
        %s354 = scalar_lea.sflag [#allocation4], %s353
        %s355 = sand.u32 %s132, 1
        %s356 = smul.addr %s355, 8
        %s357 = scalar_lea.vmem [#allocation7], %s356
        // Predicated region
        $region45: #{softmax_head_forward.1} parent=31 // pred_check
          %p358 = pneg %p142
        $region46: #{softmax_head_forward.1} parent=31 // pred_check_branch
          %360 = sbr.rel (%p358) target = $region48
        $region47: #{softmax_head_forward.1} parent=31 // pred_region
          %s362 = ssub.s32 128, 128
          %363 = vsyncadd %s354, %s362
          %s364 = smul.addr %s26, 2
          %s365 = sadd.s32 %s27, %s364
          %s366 = smul.addr %s365, 128
          %s367 = scalar_lea.hbm %s3, %s366
          %s369 = sshll.u32 %s357, 4
          %s370 = int_to_ptr.vmem [resolvable:$true] %s369
          %372 = dma.vmem_to_hbm [thread:$0]  %s370, 128, %s367, %s354
        $region48: #{softmax_head_forward.1} parent=31 // pred_fallthru
          _
      $region32: #{softmax_head_forward.1} parent=5 // pred_fallthru
        _
      %p373 = scmp.le.s32.totalorder 2, %s16
      // Predicated region
      $region49: #{softmax_head_forward.1} parent=5 // pred_check
        %p374 = pneg %p373
      $region50: #{softmax_head_forward.1} parent=5 // pred_check_branch
        %376 = sbr.rel (%p374) target = $region52
      $region51: #{softmax_head_forward.1} parent=5 // pred_region
        %s377 = ssub.s32 %s16, 2
        // Predicated region
        $region53: #{softmax_head_forward.1} parent=51 // pred_check
          %p378 = pneg %p148
        $region54: #{softmax_head_forward.1} parent=51 // pred_check_branch
          %380 = sbr.rel (%p378) target = $region56
        $region55: #{softmax_head_forward.1} parent=51 // pred_region
          %s381 = sand.u32 %s133, 1
          %s382 = scalar_lea.sflag [#allocation4], %s381
          %s383 = sand.u32 %s133, 1
          %s384 = smul.addr %s383, 8
          %s385 = scalar_lea.vmem [#allocation7], %s384
          %386 = dma.done %s382, 128
        $region56: #{softmax_head_forward.1} parent=51 // pred_fallthru
          _
      $region52: #{softmax_head_forward.1} parent=5 // pred_fallthru
        _
    $region6: #{softmax_head_forward.1} parent=1 // loop_footer
      %s20 = sadd.s32 1, %s16
    $region7: #{softmax_head_forward.1} parent=1 // loop_footer_branch
      %15 = sbr.rel target = $region3
    $region8: #{softmax_head_forward.1} parent=1 // loop_exit
      _
    %387 = vsyncpa [#allocation3], 1
    %s388 = scalar_lea.sflag [#allocation3], 1
    %389 = vsyncpa %s388, 1
    %390 = vsyncpa [#allocation6], 1
    %s391 = scalar_lea.sflag [#allocation6], 1
    %392 = vsyncpa %s391, 1
    %393 = vsyncpa [#allocation4], 1
    %s394 = scalar_lea.sflag [#allocation4], 1
    %395 = vsyncpa %s394, 1

</llo_original>
